<compile_context>
chip_gen: v5e
topology: v5e:2x2
jax: 0.10.0
libtpu: 0.0.40
codegen_flags: <defaults>
</compile_context>

<pallas_src>
import functools

import jax
import jax.numpy as jnp
from jax.experimental import pallas as pl
from jax.experimental.pallas import tpu as pltpu

_TB = 128     # batch tile (rows per grid step) — modest, avoids vreg spill on 64-wide hiddens
_LANE = 128   # lane width: pad output features to a multiple of this


def _dqn_kernel(x_ref, w1_ref, b1_ref, w2_ref, b2_ref, w3_ref, b3_ref, o_ref):
    # fc1 + tanh
    h1 = jnp.tanh(
        jnp.dot(x_ref[...], w1_ref[...], preferred_element_type=jnp.float32)
        + b1_ref[...]
    )
    # fc2 + tanh
    h2 = jnp.tanh(
        jnp.dot(h1, w2_ref[...], preferred_element_type=jnp.float32)
        + b2_ref[...]
    )
    # dropout(p=0.0) == identity (elided)
    # fc3 (w3/b3 are lane-padded to 128 cols -> fully dense store)
    o_ref[...] = (
        jnp.dot(h2, w3_ref[...], preferred_element_type=jnp.float32)
        + b3_ref[...]
    ).astype(o_ref.dtype)


@jax.jit
def deep_q_network_forward(state, w1, b1, w2, b2, w3, b3):
    batch, in_dim = state.shape
    fc1_dims = w1.shape[1]
    fc2_dims = w2.shape[1]
    n_actions = w3.shape[1]

    # --- wrapper-side padding (shapes are static under jit) -------------------
    pb = pl.cdiv(batch, _TB) * _TB                 # batch padded to tile multiple
    n_pad = pl.cdiv(n_actions, _LANE) * _LANE      # lane-dense output width

    x_p = jnp.pad(state, ((0, pb - batch), (0, 0)))
    w3_p = jnp.pad(w3, ((0, 0), (0, n_pad - n_actions)))
    b3_p = jnp.pad(b3, ((0, 0), (0, n_pad - n_actions)))

    grid = (pb // _TB,)

    cost = pl.CostEstimate(
        flops=2 * pb * (in_dim * fc1_dims + fc1_dims * fc2_dims + fc2_dims * n_pad),
        transcendentals=pb * (fc1_dims + fc2_dims),
        bytes_accessed=4 * (pb * in_dim + pb * n_pad
                            + in_dim * fc1_dims + fc1_dims
                            + fc1_dims * fc2_dims + fc2_dims
                            + fc2_dims * n_pad + n_pad),
    )

    out = pl.pallas_call(
        _dqn_kernel,
        out_shape=jax.ShapeDtypeStruct((pb, n_pad), jnp.float32),
        grid_spec=pltpu.PrefetchScalarGridSpec(
            num_scalar_prefetch=0,
            grid=grid,
            in_specs=[
                # batch tile: streamed / double-buffered across the grid
                pl.BlockSpec((_TB, in_dim), lambda i: (i, 0)),
                # weights & biases: constant block index -> resident in VMEM
                pl.BlockSpec((in_dim, fc1_dims), lambda i: (0, 0)),
                pl.BlockSpec((1, fc1_dims), lambda i: (0, 0)),
                pl.BlockSpec((fc1_dims, fc2_dims), lambda i: (0, 0)),
                pl.BlockSpec((1, fc2_dims), lambda i: (0, 0)),
                pl.BlockSpec((fc2_dims, n_pad), lambda i: (0, 0)),
                pl.BlockSpec((1, n_pad), lambda i: (0, 0)),
            ],
            out_specs=pl.BlockSpec((_TB, n_pad), lambda i: (i, 0)),
        ),
        compiler_params=pltpu.CompilerParams(
            dimension_semantics=("parallel",),   # megacore sharding on v7x
        ),
        cost_estimate=cost,
    )(x_p, w1, b1, w2, b2, w3_p, b3_p)

    # strip batch padding and lane padding
    return out[:batch, :n_actions]


def init_params(key, input_dim, fc1_dims, fc2_dims, n_actions):
    """Deterministic init mimicking nn.Linear default (U(-1/sqrt(fan_in), +1/sqrt(fan_in)))."""
    ks = jax.random.split(key, 6)

    def lin(kw, kb, fan_in, fan_out):
        bound = 1.0 / jnp.sqrt(jnp.float32(fan_in))
        w = jax.random.uniform(kw, (fan_in, fan_out), jnp.float32, -bound, bound)
        b = jax.random.uniform(kb, (1, fan_out), jnp.float32, -bound, bound)
        return w, b

    w1, b1 = lin(ks[0], ks[1], input_dim, fc1_dims)
    w2, b2 = lin(ks[2], ks[3], fc1_dims, fc2_dims)
    w3, b3 = lin(ks[4], ks[5], fc2_dims, n_actions)
    return w1, b1, w2, b2, w3, b3


if __name__ == "__main__":
    # Small shapes consistent with the module: input_dims=(8,), fc1=fc2=64, n_actions=4.
    # (NOTE: at this tiny batch, plain XLA fusion would beat Pallas launch overhead;
    #  the kernel is intended for replay-buffer-sized batches.)
    batch, input_dim, fc1_dims, fc2_dims, n_actions = 8, 8, 64, 64, 4

    key = jax.random.PRNGKey(0)
    k_state, k_params = jax.random.split(key)

    state = jax.random.normal(k_state, (batch, input_dim), dtype=jnp.float32)
    params = init_params(k_params, input_dim, fc1_dims, fc2_dims, n_actions)

    out = deep_q_network_forward(state, *params)
    out = jax.block_until_ready(out)

    # Reference check in plain JAX (same math, outside Pallas).
    w1, b1, w2, b2, w3, b3 = params
    ref = jnp.tanh(state @ w1 + b1)
    ref = jnp.tanh(ref @ w2 + b2)
    ref = ref @ w3 + b3
    assert out.shape == (batch, n_actions)
    assert jnp.allclose(out, ref, atol=1e-5, rtol=1e-5)

    print("KERNEL_OK")
</pallas_src>

<mosaic_0001>
module attributes {stable_mosaic.version = 11 : i64} {
  func.func @_dqn_kernel(%arg0: i32, %arg1: memref<128x8xf32, #tpu.memory_space<vmem>>, %arg2: memref<8x64xf32, #tpu.memory_space<vmem>>, %arg3: memref<1x64xf32, #tpu.memory_space<vmem>>, %arg4: memref<64x64xf32, #tpu.memory_space<vmem>>, %arg5: memref<1x64xf32, #tpu.memory_space<vmem>>, %arg6: memref<64x128xf32, #tpu.memory_space<vmem>>, %arg7: memref<1x128xf32, #tpu.memory_space<vmem>>, %arg8: memref<128x128xf32, #tpu.memory_space<vmem>>) attributes {dimension_semantics = [#tpu.dimension_semantics<parallel>], iteration_bounds = array<i64: 1>, scalar_prefetch = 0 : i64, scratch_operands = 0 : i64, tpu.core_type = #tpu.core_type<tc>, window_params = [{transform_indices = @transform_0, window_bounds = array<i64: 128, 8>}, {pipeline_mode = #tpu.pipeline_mode<synchronous>, transform_indices = @transform_1, window_bounds = array<i64: 8, 64>}, {pipeline_mode = #tpu.pipeline_mode<synchronous>, transform_indices = @transform_2, window_bounds = array<i64: 1, 64>}, {pipeline_mode = #tpu.pipeline_mode<synchronous>, transform_indices = @transform_3, window_bounds = array<i64: 64, 64>}, {pipeline_mode = #tpu.pipeline_mode<synchronous>, transform_indices = @transform_4, window_bounds = array<i64: 1, 64>}, {pipeline_mode = #tpu.pipeline_mode<synchronous>, transform_indices = @transform_5, window_bounds = array<i64: 64, 128>}, {pipeline_mode = #tpu.pipeline_mode<synchronous>, transform_indices = @transform_6, window_bounds = array<i64: 1, 128>}, {transform_indices = @transform_7, window_bounds = array<i64: 128, 128>}]} {
    %c0 = arith.constant 0 : index
    %c0_0 = arith.constant 0 : index
    %0 = vector.load %arg1[%c0, %c0_0] : memref<128x8xf32, #tpu.memory_space<vmem>>, vector<128x8xf32>
    %c0_1 = arith.constant 0 : index
    %c0_2 = arith.constant 0 : index
    %1 = vector.load %arg2[%c0_1, %c0_2] : memref<8x64xf32, #tpu.memory_space<vmem>>, vector<8x64xf32>
    %cst = arith.constant dense<0.000000e+00> : vector<128x64xf32>
    %2 = tpu.matmul %0, %1, %cst {dimension_numbers = #tpu.dot_dimension_numbers<[1], [0], [0], [1], [0, 0, 1, 1], [], []>} : vector<128x8xf32>, vector<8x64xf32>, vector<128x64xf32> -> vector<128x64xf32>
    %c0_3 = arith.constant 0 : index
    %c0_4 = arith.constant 0 : index
    %3 = vector.load %arg3[%c0_3, %c0_4] : memref<1x64xf32, #tpu.memory_space<vmem>>, vector<1x64xf32>
    %4 = vector.broadcast %3 : vector<1x64xf32> to vector<128x64xf32>
    %5 = arith.addf %2, %4 : vector<128x64xf32>
    %6 = math.tanh %5 : vector<128x64xf32>
    %c0_5 = arith.constant 0 : index
    %c0_6 = arith.constant 0 : index
    %7 = vector.load %arg4[%c0_5, %c0_6] : memref<64x64xf32, #tpu.memory_space<vmem>>, vector<64x64xf32>
    %cst_7 = arith.constant dense<0.000000e+00> : vector<128x64xf32>
    %8 = tpu.matmul %6, %7, %cst_7 {dimension_numbers = #tpu.dot_dimension_numbers<[1], [0], [0], [1], [0, 0, 1, 1], [], []>} : vector<128x64xf32>, vector<64x64xf32>, vector<128x64xf32> -> vector<128x64xf32>
    %c0_8 = arith.constant 0 : index
    %c0_9 = arith.constant 0 : index
    %9 = vector.load %arg5[%c0_8, %c0_9] : memref<1x64xf32, #tpu.memory_space<vmem>>, vector<1x64xf32>
    %10 = vector.broadcast %9 : vector<1x64xf32> to vector<128x64xf32>
    %11 = arith.addf %8, %10 : vector<128x64xf32>
    %12 = math.tanh %11 : vector<128x64xf32>
    %c0_10 = arith.constant 0 : index
    %c0_11 = arith.constant 0 : index
    %13 = vector.load %arg6[%c0_10, %c0_11] : memref<64x128xf32, #tpu.memory_space<vmem>>, vector<64x128xf32>
    %cst_12 = arith.constant dense<0.000000e+00> : vector<128x128xf32>
    %14 = tpu.matmul %12, %13, %cst_12 {dimension_numbers = #tpu.dot_dimension_numbers<[1], [0], [0], [1], [0, 0, 1, 1], [], []>} : vector<128x64xf32>, vector<64x128xf32>, vector<128x128xf32> -> vector<128x128xf32>
    %c0_13 = arith.constant 0 : index
    %c0_14 = arith.constant 0 : index
    %15 = vector.load %arg7[%c0_13, %c0_14] : memref<1x128xf32, #tpu.memory_space<vmem>>, vector<1x128xf32>
    %16 = vector.broadcast %15 : vector<1x128xf32> to vector<128x128xf32>
    %17 = arith.addf %14, %16 : vector<128x128xf32>
    %c0_15 = arith.constant 0 : index
    %c0_16 = arith.constant 0 : index
    %18 = vector.load %arg8[%c0_15, %c0_16] : memref<128x128xf32, #tpu.memory_space<vmem>>, vector<128x128xf32>
    tpu.vector_store %arg8[%c0_15, %c0_16], %17 {strides = array<i32>} : memref<128x128xf32, #tpu.memory_space<vmem>>, vector<128x128xf32>,
    return
  }
  func.func @transform_0(%arg0: i32) -> (i32, i32) {
    %c0_i32 = arith.constant 0 : i32
    %c0_i32_0 = arith.constant 0 : i32
    return %arg0, %c0_i32 : i32, i32
  }
  func.func @transform_1(%arg0: i32) -> (i32, i32) {
    %c0_i32 = arith.constant 0 : i32
    %c0_i32_0 = arith.constant 0 : i32
    %c0_i32_1 = arith.constant 0 : i32
    return %c0_i32, %c0_i32_0 : i32, i32
  }
  func.func @transform_2(%arg0: i32) -> (i32, i32) {
    %c0_i32 = arith.constant 0 : i32
    %c0_i32_0 = arith.constant 0 : i32
    %c0_i32_1 = arith.constant 0 : i32
    return %c0_i32, %c0_i32_0 : i32, i32
  }
  func.func @transform_3(%arg0: i32) -> (i32, i32) {
    %c0_i32 = arith.constant 0 : i32
    %c0_i32_0 = arith.constant 0 : i32
    %c0_i32_1 = arith.constant 0 : i32
    return %c0_i32, %c0_i32_0 : i32, i32
  }
  func.func @transform_4(%arg0: i32) -> (i32, i32) {
    %c0_i32 = arith.constant 0 : i32
    %c0_i32_0 = arith.constant 0 : i32
    %c0_i32_1 = arith.constant 0 : i32
    return %c0_i32, %c0_i32_0 : i32, i32
  }
  func.func @transform_5(%arg0: i32) -> (i32, i32) {
    %c0_i32 = arith.constant 0 : i32
    %c0_i32_0 = arith.constant 0 : i32
    %c0_i32_1 = arith.constant 0 : i32
    return %c0_i32, %c0_i32_0 : i32, i32
  }
  func.func @transform_6(%arg0: i32) -> (i32, i32) {
    %c0_i32 = arith.constant 0 : i32
    %c0_i32_0 = arith.constant 0 : i32
    %c0_i32_1 = arith.constant 0 : i32
    return %c0_i32, %c0_i32_0 : i32, i32
  }
  func.func @transform_7(%arg0: i32) -> (i32, i32) {
    %c0_i32 = arith.constant 0 : i32
    %c0_i32_0 = arith.constant 0 : i32
    return %arg0, %c0_i32 : i32, i32
  }
}

</mosaic_0001>

<llo_original>
// kernel: deep_q_network_forward.1
$region0: #{deep_q_network_forward.1}
  #allocation0 [shape = 'u32[]', space=smem, size = 0x4, offset = 0x4, fixed_abs, tag = 'smem constant byte address 0x4 - core index']
  #allocation1 [shape = 'u32[72,128]{1,0:T(1,128)}', space=vmem, size = 0x9000, scoped, tag = 'internal scratch']
  %s0 = inlined_call_operand.vmem [shape: f32[128,8], index: 0, kind: input, shape index: {}]
  %s1 = inlined_call_operand.vmem [shape: f32[8,64], index: 1, kind: input, shape index: {}]
  %s2 = inlined_call_operand.vmem [shape: f32[1,64], index: 2, kind: input, shape index: {}]
  %s3 = inlined_call_operand.vmem [shape: f32[64,64], index: 3, kind: input, shape index: {}]
  %s4 = inlined_call_operand.vmem [shape: f32[1,64], index: 4, kind: input, shape index: {}]
  %s5 = inlined_call_operand.vmem [shape: f32[64,128], index: 5, kind: input, shape index: {}]
  %s6 = inlined_call_operand.vmem [shape: f32[1,128], index: 6, kind: input, shape index: {}]
  %s7 = inlined_call_operand.vmem [shape: f32[128,128], index: 7, kind: output, shape index: {}]
  %s8 = sld [smem:[#allocation0]]
  $region38: #{deep_q_network_forward.1} parent=0
    _
  %s10 = ssub.s32 1, %s8
  %s11 = scalar_select 0, %s10, %s8
  // Predicated region
  $region2: #{deep_q_network_forward.1} parent=0 // pred_check
    _
  $region3: #{deep_q_network_forward.1} parent=0 // pred_check_branch
    %13 = sbr.rel (0) target = $region5
  $region4: #{deep_q_network_forward.1} parent=0 // pred_region
    _
  $region5: #{deep_q_network_forward.1} parent=0 // pred_fallthru
    _
  // Predicated region
  $region6: #{deep_q_network_forward.1} parent=0 // pred_check
    _
  $region7: #{deep_q_network_forward.1} parent=0 // pred_check_branch
    %15 = sbr.rel (0) target = $region9
  $region8: #{deep_q_network_forward.1} parent=0 // pred_region
    _
  $region9: #{deep_q_network_forward.1} parent=0 // pred_fallthru
    _
  // Predicated region
  $region10: #{deep_q_network_forward.1} parent=0 // pred_check
    _
  $region11: #{deep_q_network_forward.1} parent=0 // pred_check_branch
    %17 = sbr.rel (0) target = $region13
  $region12: #{deep_q_network_forward.1} parent=0 // pred_region
    _
  $region13: #{deep_q_network_forward.1} parent=0 // pred_fallthru
    _
  // Predicated region
  $region14: #{deep_q_network_forward.1} parent=0 // pred_check
    _
  $region15: #{deep_q_network_forward.1} parent=0 // pred_check_branch
    %19 = sbr.rel (0) target = $region17
  $region16: #{deep_q_network_forward.1} parent=0 // pred_region
    _
  $region17: #{deep_q_network_forward.1} parent=0 // pred_fallthru
    _
  // Predicated region
  $region18: #{deep_q_network_forward.1} parent=0 // pred_check
    _
  $region19: #{deep_q_network_forward.1} parent=0 // pred_check_branch
    %21 = sbr.rel (0) target = $region21
  $region20: #{deep_q_network_forward.1} parent=0 // pred_region
    _
  $region21: #{deep_q_network_forward.1} parent=0 // pred_fallthru
    _
  // Predicated region
  $region22: #{deep_q_network_forward.1} parent=0 // pred_check
    _
  $region23: #{deep_q_network_forward.1} parent=0 // pred_check_branch
    %23 = sbr.rel (0) target = $region25
  $region24: #{deep_q_network_forward.1} parent=0 // pred_region
    _
  $region25: #{deep_q_network_forward.1} parent=0 // pred_fallthru
    _
  // Predicated region
  $region26: #{deep_q_network_forward.1} parent=0 // pred_check
    _
  $region27: #{deep_q_network_forward.1} parent=0 // pred_check_branch
    %25 = sbr.rel (0) target = $region29
  $region28: #{deep_q_network_forward.1} parent=0 // pred_region
    _
  $region29: #{deep_q_network_forward.1} parent=0 // pred_fallthru
    _
  %v26 = vld [vmem:[%s0] sm:$0xff]
  %v27 = vld [vmem:[%s0 + $0x8] sm:$0xff]
  %v28 = vld [vmem:[%s0 + $0x10] sm:$0xff]
  %v29 = vld [vmem:[%s0 + $0x18] sm:$0xff]
  %v30 = vld [vmem:[%s0 + $0x20] sm:$0xff]
  %v31 = vld [vmem:[%s0 + $0x28] sm:$0xff]
  %v32 = vld [vmem:[%s0 + $0x30] sm:$0xff]
  %v33 = vld [vmem:[%s0 + $0x38] sm:$0xff]
  %v34 = vld [vmem:[%s0 + $0x40] sm:$0xff]
  %v35 = vld [vmem:[%s0 + $0x48] sm:$0xff]
  %v36 = vld [vmem:[%s0 + $0x50] sm:$0xff]
  %v37 = vld [vmem:[%s0 + $0x58] sm:$0xff]
  %v38 = vld [vmem:[%s0 + $0x60] sm:$0xff]
  %v39 = vld [vmem:[%s0 + $0x68] sm:$0xff]
  %v40 = vld [vmem:[%s0 + $0x70] sm:$0xff]
  %v41 = vld [vmem:[%s0 + $0x78] sm:$0xff]
  %v42 = vld [vmem:[%s1] sm:$0xff]
  %v43 = vld [vmem:[%s2] sm:$0x1]
  %v45 = vperm.slane %v43, 0
  %vm47 = vcmask 64512
  %v49 = vsel %vm47, %v26, 0
  %v52 = vsel %vm47, %v27, 0
  %v55 = vsel %vm47, %v28, 0
  %v58 = vsel %vm47, %v29, 0
  %v61 = vsel %vm47, %v30, 0
  %v64 = vsel %vm47, %v31, 0
  %v67 = vsel %vm47, %v32, 0
  %v70 = vsel %vm47, %v33, 0
  %v73 = vsel %vm47, %v34, 0
  %v76 = vsel %vm47, %v35, 0
  %v79 = vsel %vm47, %v36, 0
  %v82 = vsel %vm47, %v37, 0
  %v85 = vsel %vm47, %v38, 0
  %v88 = vsel %vm47, %v39, 0
  %v91 = vsel %vm47, %v40, 0
  %v94 = vsel %vm47, %v41, 0
  %96 = vmatpush.msra.mxu0 0.0
  %97 = vmatpush.msra.mxu0 0.0
  %98 = vmatpush.msra.mxu0 0.0
  %99 = vmatpush.msra.mxu0 0.0
  %100 = vmatpush.msra.mxu0 0.0
  %101 = vmatpush.msra.mxu0 0.0
  %102 = vmatpush.msra.mxu0 0.0
  %103 = vmatpush.msra.mxu0 0.0
  %104 = vmatpush.msra.mxu0 0.0
  %105 = vmatpush.msra.mxu0 0.0
  %106 = vmatpush.msra.mxu0 0.0
  %107 = vmatpush.msra.mxu0 0.0
  %108 = vmatpush.msra.mxu0 0.0
  %109 = vmatpush.msra.mxu0 0.0
  %110 = vmatpush.msra.mxu0 0.0
  %111 = vmatpush.msra.mxu0 %v42
  %112 = vmatmul.f32.gmra.mxu0 %v49
  %v113 = vpop.f32.mrf.mxu0
  %v114 = vadd.f32 %v45, %v113
  %115 = vmatmul.f32.gmra.mxu0 %v52
  %v116 = vpop.f32.mrf.mxu0
  %v117 = vadd.f32 %v45, %v116
  %118 = vmatmul.f32.gmra.mxu0 %v55
  %v119 = vpop.f32.mrf.mxu0
  %v120 = vadd.f32 %v45, %v119
  %121 = vmatmul.f32.gmra.mxu0 %v58
  %v122 = vpop.f32.mrf.mxu0
  %v123 = vadd.f32 %v45, %v122
  %124 = vmatmul.f32.gmra.mxu0 %v61
  %v125 = vpop.f32.mrf.mxu0
  %v126 = vadd.f32 %v45, %v125
  %127 = vmatmul.f32.gmra.mxu0 %v64
  %v128 = vpop.f32.mrf.mxu0
  %v129 = vadd.f32 %v45, %v128
  %130 = vmatmul.f32.gmra.mxu0 %v67
  %v131 = vpop.f32.mrf.mxu0
  %v132 = vadd.f32 %v45, %v131
  %133 = vmatmul.f32.gmra.mxu0 %v70
  %v134 = vpop.f32.mrf.mxu0
  %v135 = vadd.f32 %v45, %v134
  %136 = vmatmul.f32.gmra.mxu0 %v73
  %v137 = vpop.f32.mrf.mxu0
  %v138 = vadd.f32 %v45, %v137
  %139 = vmatmul.f32.gmra.mxu0 %v76
  %v140 = vpop.f32.mrf.mxu0
  %v141 = vadd.f32 %v45, %v140
  %142 = vmatmul.f32.gmra.mxu0 %v79
  %v143 = vpop.f32.mrf.mxu0
  %v144 = vadd.f32 %v45, %v143
  %145 = vmatmul.f32.gmra.mxu0 %v82
  %v146 = vpop.f32.mrf.mxu0
  %v147 = vadd.f32 %v45, %v146
  %148 = vmatmul.f32.gmra.mxu0 %v85
  %v149 = vpop.f32.mrf.mxu0
  %v150 = vadd.f32 %v45, %v149
  %151 = vmatmul.f32.gmra.mxu0 %v88
  %v152 = vpop.f32.mrf.mxu0
  %v153 = vadd.f32 %v45, %v152
  %154 = vmatmul.f32.gmra.mxu0 %v91
  %v155 = vpop.f32.mrf.mxu0
  %v156 = vadd.f32 %v45, %v155
  %157 = vmatmul.f32.gmra.mxu0 %v94
  %v158 = vpop.f32.mrf.mxu0
  %v159 = vadd.f32 %v45, %v158
  %160 = vdwg.mxu0
  %v161 = vtanh.pop %v114
  %v162 = vtanh.pop %v117
  %v163 = vtanh.pop %v120
  %v164 = vtanh.pop %v123
  %v165 = vtanh.pop %v126
  %v166 = vtanh.pop %v129
  %v167 = vtanh.pop %v132
  %v168 = vtanh.pop %v135
  %v169 = vtanh.pop %v138
  %v170 = vtanh.pop %v141
  %v171 = vtanh.pop %v144
  %v172 = vtanh.pop %v147
  %v173 = vtanh.pop %v150
  %v174 = vtanh.pop %v153
  %v175 = vtanh.pop %v156
  %v176 = vtanh.pop %v159
  %v177 = vld [vmem:[%s3] sm:$0xff]
  %v178 = vld [vmem:[%s3 + $0x8] sm:$0xff]
  %v179 = vld [vmem:[%s3 + $0x10] sm:$0xff]
  %v180 = vld [vmem:[%s3 + $0x18] sm:$0xff]
  %v181 = vld [vmem:[%s3 + $0x20] sm:$0xff]
  %v182 = vld [vmem:[%s3 + $0x28] sm:$0xff]
  %v183 = vld [vmem:[%s3 + $0x30] sm:$0xff]
  %v184 = vld [vmem:[%s3 + $0x38] sm:$0xff]
  %v185 = vld [vmem:[%s4] sm:$0x1]
  %v187 = vperm.slane %v185, 0
  %vm189 = vcmask 523264
  %v191 = vsel %vm189, %v161, 0
  %v194 = vsel %vm189, %v162, 0
  %v197 = vsel %vm189, %v163, 0
  %v200 = vsel %vm189, %v164, 0
  %v203 = vsel %vm189, %v165, 0
  %v206 = vsel %vm189, %v166, 0
  %v209 = vsel %vm189, %v167, 0
  %v212 = vsel %vm189, %v168, 0
  %v215 = vsel %vm189, %v169, 0
  %v218 = vsel %vm189, %v170, 0
  %v221 = vsel %vm189, %v171, 0
  %v224 = vsel %vm189, %v172, 0
  %v227 = vsel %vm189, %v173, 0
  %v230 = vsel %vm189, %v174, 0
  %v233 = vsel %vm189, %v175, 0
  %v236 = vsel %vm189, %v176, 0
  %238 = vmatpush.msra.mxu0 0.0
  %239 = vmatpush.msra.mxu0 0.0
  %240 = vmatpush.msra.mxu0 0.0
  %241 = vmatpush.msra.mxu0 0.0
  %242 = vmatpush.msra.mxu0 0.0
  %243 = vmatpush.msra.mxu0 0.0
  %244 = vmatpush.msra.mxu0 0.0
  %245 = vmatpush.msra.mxu0 0.0
  %246 = vmatpush.msra.mxu0 %v184
  %247 = vmatpush.msra.mxu0 %v183
  %248 = vmatpush.msra.mxu0 %v182
  %249 = vmatpush.msra.mxu0 %v181
  %250 = vmatpush.msra.mxu0 %v180
  %251 = vmatpush.msra.mxu0 %v179
  %252 = vmatpush.msra.mxu0 %v178
  %253 = vmatpush.msra.mxu0 %v177
  %254 = vmatmul.f32.gmra.mxu0 %v191
  %v255 = vpop.f32.mrf.mxu0
  %v256 = vadd.f32 %v187, %v255
  %257 = vmatmul.f32.gmra.mxu0 %v194
  %v258 = vpop.f32.mrf.mxu0
  %v259 = vadd.f32 %v187, %v258
  %260 = vmatmul.f32.gmra.mxu0 %v197
  %v261 = vpop.f32.mrf.mxu0
  %v262 = vadd.f32 %v187, %v261
  %263 = vmatmul.f32.gmra.mxu0 %v200
  %v264 = vpop.f32.mrf.mxu0
  %v265 = vadd.f32 %v187, %v264
  %266 = vmatmul.f32.gmra.mxu0 %v203
  %v267 = vpop.f32.mrf.mxu0
  %v268 = vadd.f32 %v187, %v267
  %269 = vmatmul.f32.gmra.mxu0 %v206
  %v270 = vpop.f32.mrf.mxu0
  %v271 = vadd.f32 %v187, %v270
  %272 = vmatmul.f32.gmra.mxu0 %v209
  %v273 = vpop.f32.mrf.mxu0
  %v274 = vadd.f32 %v187, %v273
  %275 = vmatmul.f32.gmra.mxu0 %v212
  %v276 = vpop.f32.mrf.mxu0
  %v277 = vadd.f32 %v187, %v276
  %278 = vmatmul.f32.gmra.mxu0 %v215
  %v279 = vpop.f32.mrf.mxu0
  %v280 = vadd.f32 %v187, %v279
  %281 = vmatmul.f32.gmra.mxu0 %v218
  %v282 = vpop.f32.mrf.mxu0
  %v283 = vadd.f32 %v187, %v282
  %284 = vmatmul.f32.gmra.mxu0 %v221
  %v285 = vpop.f32.mrf.mxu0
  %v286 = vadd.f32 %v187, %v285
  %287 = vmatmul.f32.gmra.mxu0 %v224
  %v288 = vpop.f32.mrf.mxu0
  %v289 = vadd.f32 %v187, %v288
  %290 = vmatmul.f32.gmra.mxu0 %v227
  %v291 = vpop.f32.mrf.mxu0
  %v292 = vadd.f32 %v187, %v291
  %293 = vmatmul.f32.gmra.mxu0 %v230
  %v294 = vpop.f32.mrf.mxu0
  %v295 = vadd.f32 %v187, %v294
  %296 = vmatmul.f32.gmra.mxu0 %v233
  %v297 = vpop.f32.mrf.mxu0
  %v298 = vadd.f32 %v187, %v297
  %299 = vmatmul.f32.gmra.mxu0 %v236
  %v300 = vpop.f32.mrf.mxu0
  %v301 = vadd.f32 %v187, %v300
  %302 = vdwg.mxu0
  %v303 = vtanh.pop %v256
  %v304 = vtanh.pop %v259
  %v305 = vtanh.pop %v262
  %v306 = vtanh.pop %v265
  %v307 = vtanh.pop %v268
  %v308 = vtanh.pop %v271
  %v309 = vtanh.pop %v274
  %v310 = vtanh.pop %v277
  %v311 = vtanh.pop %v280
  %v312 = vtanh.pop %v283
  %v313 = vtanh.pop %v286
  %v314 = vtanh.pop %v289
  %v315 = vtanh.pop %v292
  %v316 = vtanh.pop %v295
  %v317 = vtanh.pop %v298
  %v318 = vtanh.pop %v301
  %v319 = vld [vmem:[%s5] sm:$0xff]
  %v320 = vld [vmem:[%s5 + $0x8] sm:$0xff]
  %v321 = vld [vmem:[%s5 + $0x10] sm:$0xff]
  %v322 = vld [vmem:[%s5 + $0x18] sm:$0xff]
  %v323 = vld [vmem:[%s5 + $0x20] sm:$0xff]
  %v324 = vld [vmem:[%s5 + $0x28] sm:$0xff]
  %v325 = vld [vmem:[%s5 + $0x30] sm:$0xff]
  %v326 = vld [vmem:[%s5 + $0x38] sm:$0xff]
  %v327 = vld [vmem:[%s6] sm:$0x1]
  %v329 = vperm.slane %v327, 0
  %v332 = vsel %vm189, %v303, 0
  %v335 = vsel %vm189, %v304, 0
  %v338 = vsel %vm189, %v305, 0
  %v341 = vsel %vm189, %v306, 0
  %v344 = vsel %vm189, %v307, 0
  %v347 = vsel %vm189, %v308, 0
  %v350 = vsel %vm189, %v309, 0
  %v353 = vsel %vm189, %v310, 0
  %v356 = vsel %vm189, %v311, 0
  %v359 = vsel %vm189, %v312, 0
  %v362 = vsel %vm189, %v313, 0
  %v365 = vsel %vm189, %v314, 0
  %v368 = vsel %vm189, %v315, 0
  %v371 = vsel %vm189, %v316, 0
  %v374 = vsel %vm189, %v317, 0
  %v377 = vsel %vm189, %v318, 0
  %379 = vmatpush.msra.mxu0 0.0
  %380 = vmatpush.msra.mxu0 0.0
  %381 = vmatpush.msra.mxu0 0.0
  %382 = vmatpush.msra.mxu0 0.0
  %383 = vmatpush.msra.mxu0 0.0
  %384 = vmatpush.msra.mxu0 0.0
  %385 = vmatpush.msra.mxu0 0.0
  %386 = vmatpush.msra.mxu0 0.0
  %387 = vmatpush.msra.mxu0 %v326
  %388 = vmatpush.msra.mxu0 %v325
  %389 = vmatpush.msra.mxu0 %v324
  %390 = vmatpush.msra.mxu0 %v323
  %391 = vmatpush.msra.mxu0 %v322
  %392 = vmatpush.msra.mxu0 %v321
  %393 = vmatpush.msra.mxu0 %v320
  %394 = vmatpush.msra.mxu0 %v319
  %395 = vmatmul.f32.gmra.mxu0 %v332
  %v396 = vpop.f32.mrf.mxu0
  %v397 = vadd.f32 %v329, %v396
  %398 = vmatmul.f32.gmra.mxu0 %v335
  %v399 = vpop.f32.mrf.mxu0
  %v400 = vadd.f32 %v329, %v399
  %401 = vmatmul.f32.gmra.mxu0 %v338
  %v402 = vpop.f32.mrf.mxu0
  %v403 = vadd.f32 %v329, %v402
  %404 = vmatmul.f32.gmra.mxu0 %v341
  %v405 = vpop.f32.mrf.mxu0
  %v406 = vadd.f32 %v329, %v405
  %407 = vmatmul.f32.gmra.mxu0 %v344
  %v408 = vpop.f32.mrf.mxu0
  %v409 = vadd.f32 %v329, %v408
  %410 = vmatmul.f32.gmra.mxu0 %v347
  %v411 = vpop.f32.mrf.mxu0
  %v412 = vadd.f32 %v329, %v411
  %413 = vmatmul.f32.gmra.mxu0 %v350
  %v414 = vpop.f32.mrf.mxu0
  %v415 = vadd.f32 %v329, %v414
  %416 = vmatmul.f32.gmra.mxu0 %v353
  %v417 = vpop.f32.mrf.mxu0
  %v418 = vadd.f32 %v329, %v417
  %419 = vmatmul.f32.gmra.mxu0 %v356
  %v420 = vpop.f32.mrf.mxu0
  %v421 = vadd.f32 %v329, %v420
  %422 = vmatmul.f32.gmra.mxu0 %v359
  %v423 = vpop.f32.mrf.mxu0
  %v424 = vadd.f32 %v329, %v423
  %425 = vmatmul.f32.gmra.mxu0 %v362
  %v426 = vpop.f32.mrf.mxu0
  %v427 = vadd.f32 %v329, %v426
  %428 = vmatmul.f32.gmra.mxu0 %v365
  %v429 = vpop.f32.mrf.mxu0
  %v430 = vadd.f32 %v329, %v429
  %431 = vmatmul.f32.gmra.mxu0 %v368
  %v432 = vpop.f32.mrf.mxu0
  %v433 = vadd.f32 %v329, %v432
  %434 = vmatmul.f32.gmra.mxu0 %v371
  %v435 = vpop.f32.mrf.mxu0
  %v436 = vadd.f32 %v329, %v435
  %437 = vmatmul.f32.gmra.mxu0 %v374
  %v438 = vpop.f32.mrf.mxu0
  %v439 = vadd.f32 %v329, %v438
  %440 = vmatmul.f32.gmra.mxu0 %v377
  %v441 = vpop.f32.mrf.mxu0
  %v442 = vadd.f32 %v329, %v441
  %443 = vdwg.mxu0
  %444 = vst [vmem:[%s7] sm:$0xff] %v397
  %445 = vst [vmem:[%s7 + $0x8] sm:$0xff] %v400
  %446 = vst [vmem:[%s7 + $0x10] sm:$0xff] %v403
  %447 = vst [vmem:[%s7 + $0x18] sm:$0xff] %v406
  %448 = vst [vmem:[%s7 + $0x20] sm:$0xff] %v409
  %449 = vst [vmem:[%s7 + $0x28] sm:$0xff] %v412
  %450 = vst [vmem:[%s7 + $0x30] sm:$0xff] %v415
  %451 = vst [vmem:[%s7 + $0x38] sm:$0xff] %v418
  %452 = vst [vmem:[%s7 + $0x40] sm:$0xff] %v421
  %453 = vst [vmem:[%s7 + $0x48] sm:$0xff] %v424
  %454 = vst [vmem:[%s7 + $0x50] sm:$0xff] %v427
  %455 = vst [vmem:[%s7 + $0x58] sm:$0xff] %v430
  %456 = vst [vmem:[%s7 + $0x60] sm:$0xff] %v433
  %457 = vst [vmem:[%s7 + $0x68] sm:$0xff] %v436
  %458 = vst [vmem:[%s7 + $0x70] sm:$0xff] %v439
  %459 = vst [vmem:[%s7 + $0x78] sm:$0xff] %v442
  // Predicated region
  $region30: #{deep_q_network_forward.1} parent=0 // pred_check
    _
  $region31: #{deep_q_network_forward.1} parent=0 // pred_check_branch
    %461 = sbr.rel (0) target = $region33
  $region32: #{deep_q_network_forward.1} parent=0 // pred_region
    _
  $region33: #{deep_q_network_forward.1} parent=0 // pred_fallthru
    _
  // Predicated region
  $region34: #{deep_q_network_forward.1} parent=0 // pred_check
    _
  $region35: #{deep_q_network_forward.1} parent=0 // pred_check_branch
    %463 = sbr.rel (0) target = $region37
  $region36: #{deep_q_network_forward.1} parent=0 // pred_region
    _
  $region37: #{deep_q_network_forward.1} parent=0 // pred_fallthru
    _

</llo_original>
